<compile_context>
chip_gen: v7x
topology: tpu7x:2x2x1
jax: 0.10.0
libtpu: 0.0.40
codegen_flags: <defaults>
</compile_context>

<pallas_src>
import jax
import jax.numpy as jnp
from jax.experimental import pallas as pl
from jax.experimental.pallas import tpu as pltpu

_LANES = 128
_BLOCK_BYTES_TARGET = 4 * 1024 * 1024   # ~4 MiB per operand block
_VMEM_LIMIT_BYTES = 32 * 1024 * 1024    # 2 in + 2 out bufs (16 MiB) + slack,
                                        # safe on v5e/v6e/v7x physical VMEM.


def _round_up(a: int, m: int) -> int:
    return -(-a // m) * m


def _sublane_packing(dtype) -> int:
    # Native sublane packing: 8 rows for 32-bit, 16 for 16-bit dtypes.
    itemsize = jnp.dtype(dtype).itemsize
    return max(8, 32 // itemsize)


def _scale_kernel(scale_ref, x_ref, o_ref):
    # scale_ref: (1,) float32 in SMEM (scalar-prefetched).
    # Cast the scalar once to the tile dtype -> native-dtype multiply
    # (no f32 promotion of the whole tile for bf16 inputs).
    s = scale_ref[0].astype(x_ref.dtype)
    o_ref[...] = x_ref[...] * s


def scale_layer(
    x: jax.Array,
    scale: jax.Array,
    *,
    min_pallas_elems: int = 65536,
    donate: bool = False,
    block_bytes: int = _BLOCK_BYTES_TARGET,
) -> jax.Array:
    """Computes x * scale (scale is a 1-element learnable parameter), like ScaleLayer."""
    orig_shape = x.shape
    orig_dtype = x.dtype
    n = x.size
    scale_f32 = jnp.asarray(scale, dtype=jnp.float32).reshape((1,))

    # Fallback: tiny inputs (pallas_call fixed overhead > the multiply), flat
    # sizes not divisible by 128 lanes (would need a pad+slice round trip),
    # or non-float dtypes (scaling by 0.001 and casting back to an integer
    # dtype is semantically dubious).  Let XLA fuse the multiply.
    if (
        n < min_pallas_elems
        or n % _LANES != 0
        or not jnp.issubdtype(orig_dtype, jnp.floating)
    ):
        return (x * scale_f32[0]).astype(orig_dtype)

    rows = n // _LANES
    subl = _sublane_packing(orig_dtype)
    itemsize = jnp.dtype(orig_dtype).itemsize

    # ~4 MiB row-blocks (multiple of the native sublane packing), clamped to
    # the array for small inputs.  grid = cdiv(rows, tm): Pallas clips the
    # ragged last block, so no wrapper-side pad / slice is ever materialized.
    tm_max = _round_up(max(block_bytes, 1) // (_LANES * itemsize), subl)
    tm = min(tm_max, _round_up(rows, subl))
    grid = (pl.cdiv(rows, tm),)

    # Free reshape: the (rows, 128) slab is the same contiguous buffer, and
    # each (tm, 128) block is a contiguous HBM span (full-width, unmasked vst).
    x2d = x.reshape(rows, _LANES)

    # Alias indices count ALL pallas_call operands (scalar prefetch first):
    # 0 = scale_f32, 1 = x2d.
    aliases = {1: 0} if donate else {}

    out2d = pl.pallas_call(
        _scale_kernel,
        out_shape=jax.ShapeDtypeStruct((rows, _LANES), orig_dtype),
        grid_spec=pltpu.PrefetchScalarGridSpec(
            num_scalar_prefetch=1,            # scale lands in SMEM before the grid
            grid=grid,
            in_specs=[
                pl.BlockSpec((tm, _LANES), lambda i, scale_ref: (i, 0)),
            ],
            out_specs=pl.BlockSpec((tm, _LANES), lambda i, scale_ref: (i, 0)),
        ),
        compiler_params=pltpu.CompilerParams(
            dimension_semantics=("parallel",),
            vmem_limit_bytes=_VMEM_LIMIT_BYTES,
        ),
        input_output_aliases=aliases,
    )(scale_f32, x2d)

    return out2d.reshape(orig_shape)


if __name__ == "__main__":
    key = jax.random.PRNGKey(0)

    # Deterministic parameter init, same as nn.Parameter(torch.FloatTensor([0.001]))
    init_value = 0.001
    scale = jnp.array([init_value], dtype=jnp.float32)

    # Example input consistent with an NCHW conv feature map.
    x = jax.random.normal(key, (2, 4, 16, 16), dtype=jnp.float32)
    ref = x * scale[0]

    # --- Pallas path (forced; the default threshold would route this small
    # demo tensor to the fused plain-JAX fallback, which is faster there).
    out = jax.block_until_ready(scale_layer(x, scale, min_pallas_elems=0))
    assert out.shape == x.shape and out.dtype == x.dtype
    assert jnp.allclose(out, ref, atol=1e-6, rtol=1e-6)

    # --- bf16 path: scalar-prefetched f32 scale, native-dtype multiply.
    x_bf16 = x.astype(jnp.bfloat16)
    out_bf16 = jax.block_until_ready(scale_layer(x_bf16, scale, min_pallas_elems=0))
    ref_bf16 = (x_bf16 * scale[0]).astype(jnp.bfloat16)
    assert out_bf16.dtype == jnp.bfloat16
    assert jnp.allclose(out_bf16.astype(jnp.float32), ref_bf16.astype(jnp.float32),
                        atol=1e-5, rtol=2e-2)

    # --- Multi-step grid + ragged last block (small block_bytes override so a
    # modest array exercises the pipelined path: rows=1160 -> 9 full 128-row
    # blocks + one 8-row tail block that Pallas clips).
    key, sub = jax.random.split(key)
    x_med = jax.random.normal(sub, (145, 1024), dtype=jnp.float32)
    out_med = jax.block_until_ready(
        scale_layer(x_med, scale, min_pallas_elems=0, block_bytes=64 * 1024)
    )
    assert jnp.allclose(out_med, x_med * scale[0], atol=1e-6, rtol=1e-6)

    # --- Donated / aliased path (x2d buffer reused for the output).
    donated_fn = jax.jit(
        lambda xx: scale_layer(xx, scale, min_pallas_elems=0, donate=True),
        donate_argnums=0,
    )
    x_don = x + 0.0  # fresh buffer that is safe to donate
    out_don = jax.block_until_ready(donated_fn(x_don))
    assert jnp.allclose(out_don, ref, atol=1e-6, rtol=1e-6)

    # --- Default wrapper (small-input fallback) path.
    out_small = jax.block_until_ready(scale_layer(x, scale))
    assert jnp.allclose(out_small, ref, atol=1e-6, rtol=1e-6)

    print("KERNEL_OK")
</pallas_src>

<mosaic_0001>
module attributes {stable_mosaic.version = 11 : i64} {
  func.func @_scale_kernel(%arg0: i32, %arg1: memref<1xf32, #tpu.memory_space<smem>>, %arg2: memref<16x128xf32, #tpu.memory_space<vmem>>, %arg3: memref<16x128xf32, #tpu.memory_space<vmem>>) attributes {dimension_semantics = [#tpu.dimension_semantics<parallel>], iteration_bounds = array<i64: 1>, scalar_prefetch = 1 : i64, scratch_operands = 0 : i64, tpu.core_type = #tpu.core_type<tc>, window_params = [{transform_indices = @transform_0, window_bounds = array<i64: 16, 128>}, {transform_indices = @transform_1, window_bounds = array<i64: 16, 128>}]} {
    %c0 = arith.constant 0 : index
    %0 = memref.load %arg1[%c0] : memref<1xf32, #tpu.memory_space<smem>>
    %c0_0 = arith.constant 0 : index
    %c0_1 = arith.constant 0 : index
    %1 = vector.load %arg2[%c0_0, %c0_1] : memref<16x128xf32, #tpu.memory_space<vmem>>, vector<16x128xf32>
    %2 = vector.broadcast %0 : f32 to vector<16x128xf32>
    %3 = arith.mulf %1, %2 : vector<16x128xf32>
    %c0_2 = arith.constant 0 : index
    %c0_3 = arith.constant 0 : index
    %4 = vector.load %arg3[%c0_2, %c0_3] : memref<16x128xf32, #tpu.memory_space<vmem>>, vector<16x128xf32>
    tpu.vector_store %arg3[%c0_2, %c0_3], %3 {strides = array<i32>} : memref<16x128xf32, #tpu.memory_space<vmem>>, vector<16x128xf32>,
    return
  }
  func.func @transform_0(%arg0: i32, %arg1: memref<1xf32, #tpu.memory_space<smem>>) -> (i32, i32) {
    %c0_i32 = arith.constant 0 : i32
    %c0_i32_0 = arith.constant 0 : i32
    return %arg0, %c0_i32 : i32, i32
  }
  func.func @transform_1(%arg0: i32, %arg1: memref<1xf32, #tpu.memory_space<smem>>) -> (i32, i32) {
    %c0_i32 = arith.constant 0 : i32
    %c0_i32_0 = arith.constant 0 : i32
    return %arg0, %c0_i32 : i32, i32
  }
}

</mosaic_0001>

<llo_original>
// kernel: tpu_custom_call.1
$region0: #{tpu_custom_call.1}
  #allocation0 [shape = 'u32[]', space=smem, size = 0x4, offset = 0x4, fixed_abs, tag = 'smem constant byte address 0x4 - core index']
  #allocation1 [shape = 'u32[144,128]{1,0:T(1,128)}', space=vmem, size = 0x12000, scoped, tag = 'internal scratch']
  #allocation2 [shape = 's32[1]{0}', space=sflag, size = 0x4, scoped, tag = 'scoped memory for tpu_custom_call.1']
  #allocation3 [shape = 'f32[1]{0:T(128)S(6)}', space=smem, size = 0x200, scoped, tag = 'prefetched SMEM operand 0']
  %s0 = inlined_call_operand.<no memory space> [shape: f32[1], index: 0, kind: input, shape index: {}]
  %s1 = inlined_call_operand.hbm [shape: f32[16,128], index: 1, kind: input, shape index: {}]
  %s2 = inlined_call_operand.hbm [shape: f32[16,128], index: 2, kind: output, shape index: {}]
  %s3 = sld [smem:[#allocation0]]
  $region18: #{tpu_custom_call.1} parent=0
    _
  %s5 = ssub.s32 1, %s3
  %s6 = scalar_select 0, %s5, %s3
  %7 = sst [smem:[#allocation3]] %s0
  $region1: #{tpu_custom_call.1} parent=0
    #allocation4 [shape = 'u8[8192]{0}', space=vmem, size = 0x2000, scoped, tag = 'input window, operand 1, single buffered']
    #allocation5 [shape = 's32[1]{0}', space=sflag, size = 0x4, scoped, tag = 'scoped memory for tpu_custom_call.1']
    #allocation6 [shape = 's32[1]{0}', space=sflag, size = 0x4, scoped, tag = 'scoped memory for tpu_custom_call.1']
    #allocation7 [shape = 'u8[8192]{0}', space=vmem, size = 0x2000, scoped, tag = 'output window, operand 0, single buffered']
    %8 = vsyncpa [#allocation5], 0
    %9 = vsyncpa [#allocation6], 0
    // Predicated region
    $region2: #{tpu_custom_call.1} parent=1 // pred_check
      _
    $region3: #{tpu_custom_call.1} parent=1 // pred_check_branch
      %11 = sbr.rel (0) target = $region5
    $region4: #{tpu_custom_call.1} parent=1 // pred_region
      %s13 = ssub.s32 256, 256
      %14 = vsyncadd [#allocation5], %s13
      %s15 = sshll.u32 [#allocation4], 4
      %s16 = int_to_ptr.vmem [resolvable:$true] %s15
      %21 = dma.hbm_to_vmem [thread:$0]  %s1, 256, %s16, [#allocation5], 128, 128, 8
    $region5: #{tpu_custom_call.1} parent=1 // pred_fallthru
      _
    // Predicated region
    $region6: #{tpu_custom_call.1} parent=1 // pred_check
      _
    $region7: #{tpu_custom_call.1} parent=1 // pred_check_branch
      %23 = sbr.rel (0) target = $region9
    $region8: #{tpu_custom_call.1} parent=1 // pred_region
      %24 = dma.done [#allocation5], 256
    $region9: #{tpu_custom_call.1} parent=1 // pred_fallthru
      _
    %s25 = sld [smem:[#allocation3]]
    %v26 = vld [vmem:[#allocation4] sm:$0xff]
    %v27 = vld [vmem:[#allocation4 + $0x8] sm:$0xff]
    %v28 = vstv %s25
    %v29 = vmul.f32 %v26, %v28
    %v30 = vmul.f32 %v27, %v28
    %31 = vst [vmem:[#allocation7] sm:$0xff] %v29
    %32 = vst [vmem:[#allocation7 + $0x8] sm:$0xff] %v30
    // Predicated region
    $region10: #{tpu_custom_call.1} parent=1 // pred_check
      _
    $region11: #{tpu_custom_call.1} parent=1 // pred_check_branch
      %34 = sbr.rel (0) target = $region13
    $region12: #{tpu_custom_call.1} parent=1 // pred_region
      %s36 = ssub.s32 256, 256
      %37 = vsyncadd [#allocation6], %s36
      %s38 = sshll.u32 [#allocation7], 4
      %s39 = int_to_ptr.vmem [resolvable:$true] %s38
      %44 = dma.vmem_to_hbm [thread:$0]  %s39, 256, %s2, [#allocation6], 128, 128, 8
    $region13: #{tpu_custom_call.1} parent=1 // pred_fallthru
      _
    // Predicated region
    $region14: #{tpu_custom_call.1} parent=1 // pred_check
      _
    $region15: #{tpu_custom_call.1} parent=1 // pred_check_branch
      %46 = sbr.rel (0) target = $region17
    $region16: #{tpu_custom_call.1} parent=1 // pred_region
      %47 = dma.done [#allocation6], 256
    $region17: #{tpu_custom_call.1} parent=1 // pred_fallthru
      _
    %48 = vsyncpa [#allocation5], 1
    %49 = vsyncpa [#allocation6], 1

</llo_original>
